<compile_context>
chip_gen: v6e
topology: v6e:2x2x1
jax: 0.10.0
libtpu: 0.0.40
codegen_flags: <defaults>
</compile_context>

<pallas_src>
import jax
import jax.numpy as jnp
from jax import lax
from jax.experimental import pallas as pl
from jax.experimental.pallas import tpu as pltpu


def _feature_body(sc_ref, x_ref, w1_ref, b1_ref, w2_ref, b2_ref, u_ref, s_ref):
    """MLP feature extractor + per-row RBF statistic (computed once)."""
    inv_ls = sc_ref[0]  # 1 / lengthscale (scalar, SMEM)

    h = jnp.dot(x_ref[...], w1_ref[...], preferred_element_type=jnp.float32)
    h = jnp.maximum(h + b1_ref[...], 0.0)
    z = jnp.dot(h, w2_ref[...], preferred_element_type=jnp.float32) + b2_ref[...]

    u = z * inv_ls                                         # (Np, L)
    u_ref[...] = u
    s_ref[...] = -0.5 * jnp.sum(u * u, axis=-1, keepdims=True)   # (Np, 1)


def _rbf_tile_body(ui_ref, uj_ref, si_ref, sj_ref, k_ref):
    """One (tile, tile) output tile: K = exp(g + s_i + s_j + log(outputscale))."""
    g = lax.dot_general(
        ui_ref[...], uj_ref[...],
        dimension_numbers=(((1,), (1,)), ((), ())),  # contract last dim of both (no transpose)
        preferred_element_type=jnp.float32)
    k_ref[...] = jnp.exp(g + si_ref[...] + sj_ref[...])


def deep_kernel_no_grad(x, w1, b1, w2, b2, lengthscale, outputscale):
    """x: (N, D) -> K: (N, N) deep-kernel covariance (float32)."""
    # TODO(synk): gpytorch RBFKernel with ARD uses per-dimension lengthscales;
    # this implements the single-scalar-lengthscale variant only.
    N, D = x.shape
    L = w2.shape[1]

    # Pad the batch dim to a multiple of 128 -> lane-dense, unmasked output stores.
    n_pad = int(pl.cdiv(N, 128)) * 128
    tile = 128
    for cand in (512, 256):
        if n_pad % cand == 0:
            tile = cand
            break

    x_p = jnp.zeros((n_pad, D), jnp.float32).at[:N, :].set(x)
    scalars = jnp.asarray([1.0], jnp.float32) / jnp.float32(lengthscale)  # (1,) SMEM scalar

    full = lambda a: pl.BlockSpec(a.shape, lambda *_: (0,) * a.ndim)
    smem = pl.BlockSpec(memory_space=pltpu.MemorySpace.SMEM)

    # --- Kernel 1: features u and row statistic s, computed once -------------
    u, s_col = pl.pallas_call(
        _feature_body,
        out_shape=(
            jax.ShapeDtypeStruct((n_pad, L), jnp.float32),
            jax.ShapeDtypeStruct((n_pad, 1), jnp.float32),
        ),
        in_specs=[smem, full(x_p), full(w1), full(b1), full(w2), full(b2)],
        out_specs=(
            pl.BlockSpec((n_pad, L), lambda *_: (0, 0)),
            pl.BlockSpec((n_pad, 1), lambda *_: (0, 0)),
        ),
    )(scalars, x_p, w1, b1, w2, b2)

    # Row-broadcast copy of s with log(outputscale) folded in (one-time O(N)
    # layout plumbing; removes the per-output-element outputscale multiply).
    s_row = s_col.reshape(1, n_pad) + jnp.log(jnp.float32(outputscale))

    # --- Kernel 2: tiled pairwise RBF epilogue --------------------------------
    grid = (n_pad // tile, n_pad // tile)
    k_full = pl.pallas_call(
        _rbf_tile_body,
        out_shape=jax.ShapeDtypeStruct((n_pad, n_pad), jnp.float32),
        grid=grid,
        in_specs=[
            pl.BlockSpec((tile, L), lambda i, j: (i, 0)),   # u row block
            pl.BlockSpec((tile, L), lambda i, j: (j, 0)),   # u col block
            pl.BlockSpec((tile, 1), lambda i, j: (i, 0)),   # s_i
            pl.BlockSpec((1, tile), lambda i, j: (0, j)),   # s_j + log(outputscale)
        ],
        out_specs=pl.BlockSpec((tile, tile), lambda i, j: (i, j)),
        compiler_params=pltpu.CompilerParams(
            dimension_semantics=("parallel", "parallel")),
    )(u, u, s_col, s_row)

    return k_full[:N, :N]


def _reference(x, w1, b1, w2, b2, lengthscale, outputscale):
    h = jnp.maximum(x @ w1 + b1, 0.0)
    z = (h @ w2 + b2) / lengthscale
    d2 = jnp.sum((z[:, None, :] - z[None, :, :]) ** 2, axis=-1)
    return outputscale * jnp.exp(-0.5 * d2)


if __name__ == "__main__":
    key = jax.random.PRNGKey(0)
    N, D, H, L = 8, 16, 32, 8  # batch, input dim, hidden dim, latent (kernel) dim

    k1, k2, k3, k4, k5 = jax.random.split(key, 5)
    x = jax.random.normal(k1, (N, D), dtype=jnp.float32)
    w1 = jax.random.normal(k2, (D, H), dtype=jnp.float32) * (1.0 / jnp.sqrt(D))
    b1 = jax.random.normal(k3, (1, H), dtype=jnp.float32) * 0.1
    w2 = jax.random.normal(k4, (H, L), dtype=jnp.float32) * (1.0 / jnp.sqrt(H))
    b2 = jax.random.normal(k5, (1, L), dtype=jnp.float32) * 0.1
    lengthscale = 1.5
    outputscale = 0.8

    out = deep_kernel_no_grad(x, w1, b1, w2, b2, lengthscale, outputscale)
    out = jax.block_until_ready(out)

    ref = _reference(x, w1, b1, w2, b2, lengthscale, outputscale)
    assert out.shape == (N, N)
    assert jnp.allclose(out, ref, atol=1e-4, rtol=1e-4), "mismatch vs reference"

    print("KERNEL_OK")
</pallas_src>

<mosaic_0001>
module attributes {stable_mosaic.version = 11 : i64} {
  func.func @_feature_body(%arg0: memref<1xf32, #tpu.memory_space<smem>>, %arg1: memref<128x16xf32, #tpu.memory_space<vmem>>, %arg2: memref<16x32xf32, #tpu.memory_space<vmem>>, %arg3: memref<1x32xf32, #tpu.memory_space<vmem>>, %arg4: memref<32x8xf32, #tpu.memory_space<vmem>>, %arg5: memref<1x8xf32, #tpu.memory_space<vmem>>, %arg6: memref<128x8xf32, #tpu.memory_space<vmem>>, %arg7: memref<128x1xf32, #tpu.memory_space<vmem>>) attributes {dimension_semantics = [], scalar_prefetch = 0 : i64, scratch_operands = 0 : i64, tpu.core_type = #tpu.core_type<tc>} {
    %c0 = arith.constant 0 : index
    %0 = memref.load %arg0[%c0] : memref<1xf32, #tpu.memory_space<smem>>
    %c0_0 = arith.constant 0 : index
    %c0_1 = arith.constant 0 : index
    %1 = vector.load %arg1[%c0_0, %c0_1] : memref<128x16xf32, #tpu.memory_space<vmem>>, vector<128x16xf32>
    %c0_2 = arith.constant 0 : index
    %c0_3 = arith.constant 0 : index
    %2 = vector.load %arg2[%c0_2, %c0_3] : memref<16x32xf32, #tpu.memory_space<vmem>>, vector<16x32xf32>
    %cst = arith.constant dense<0.000000e+00> : vector<128x32xf32>
    %3 = tpu.matmul %1, %2, %cst {dimension_numbers = #tpu.dot_dimension_numbers<[1], [0], [0], [1], [0, 0, 1, 1], [], []>} : vector<128x16xf32>, vector<16x32xf32>, vector<128x32xf32> -> vector<128x32xf32>
    %c0_4 = arith.constant 0 : index
    %c0_5 = arith.constant 0 : index
    %4 = vector.load %arg3[%c0_4, %c0_5] : memref<1x32xf32, #tpu.memory_space<vmem>>, vector<1x32xf32>
    %5 = vector.broadcast %4 : vector<1x32xf32> to vector<128x32xf32>
    %6 = arith.addf %3, %5 : vector<128x32xf32>
    %cst_6 = arith.constant 0.000000e+00 : f32
    %7 = vector.broadcast %cst_6 : f32 to vector<128x32xf32>
    %8 = arith.maximumf %6, %7 : vector<128x32xf32>
    %c0_7 = arith.constant 0 : index
    %c0_8 = arith.constant 0 : index
    %9 = vector.load %arg4[%c0_7, %c0_8] : memref<32x8xf32, #tpu.memory_space<vmem>>, vector<32x8xf32>
    %cst_9 = arith.constant dense<0.000000e+00> : vector<128x8xf32>
    %10 = tpu.matmul %8, %9, %cst_9 {dimension_numbers = #tpu.dot_dimension_numbers<[1], [0], [0], [1], [0, 0, 1, 1], [], []>} : vector<128x32xf32>, vector<32x8xf32>, vector<128x8xf32> -> vector<128x8xf32>
    %c0_10 = arith.constant 0 : index
    %c0_11 = arith.constant 0 : index
    %11 = vector.load %arg5[%c0_10, %c0_11] : memref<1x8xf32, #tpu.memory_space<vmem>>, vector<1x8xf32>
    %12 = vector.broadcast %11 : vector<1x8xf32> to vector<128x8xf32>
    %13 = arith.addf %10, %12 : vector<128x8xf32>
    %14 = vector.broadcast %0 : f32 to vector<128x8xf32>
    %15 = arith.mulf %13, %14 : vector<128x8xf32>
    %c0_12 = arith.constant 0 : index
    %c0_13 = arith.constant 0 : index
    %16 = vector.load %arg6[%c0_12, %c0_13] : memref<128x8xf32, #tpu.memory_space<vmem>>, vector<128x8xf32>
    tpu.vector_store %arg6[%c0_12, %c0_13], %15 {strides = array<i32>} : memref<128x8xf32, #tpu.memory_space<vmem>>, vector<128x8xf32>,
    %17 = arith.mulf %15, %15 : vector<128x8xf32>
    %cst_14 = arith.constant dense<0.000000e+00> : vector<128xf32>
    %18 = vector.multi_reduction <add>, %17, %cst_14 [1] : vector<128x8xf32> to vector<128xf32>
    %19 = vector.shape_cast %18 : vector<128xf32> to vector<128x1xf32>
    %cst_15 = arith.constant -5.000000e-01 : f32
    %20 = vector.broadcast %cst_15 : f32 to vector<128x1xf32>
    %21 = arith.mulf %20, %19 : vector<128x1xf32>
    %c0_16 = arith.constant 0 : index
    %c0_17 = arith.constant 0 : index
    %22 = vector.load %arg7[%c0_16, %c0_17] : memref<128x1xf32, #tpu.memory_space<vmem>>, vector<128x1xf32>
    tpu.vector_store %arg7[%c0_16, %c0_17], %21 {strides = array<i32>} : memref<128x1xf32, #tpu.memory_space<vmem>>, vector<128x1xf32>,
    return
  }
}

</mosaic_0001>

<llo_original>
// kernel: tpu_custom_call.1
$region0: #{tpu_custom_call.1}
  #allocation0 [shape = 'u32[]', space=smem, size = 0x4, offset = 0x4, fixed_abs, tag = 'smem constant byte address 0x4 - core index']
  #allocation1 [shape = 'u32[144,128]{1,0:T(1,128)}', space=vmem, size = 0x12000, scoped, tag = 'internal scratch']
  #allocation2 [shape = 'f32[1]{0:T(128)S(6)}', space=smem, size = 0x200, scoped, tag = 'scoped memory for tpu_custom_call.1']
  %s0 = inlined_call_operand.<no memory space> [shape: f32[1], index: 0, kind: input, shape index: {}]
  %s1 = inlined_call_operand.vmem [shape: f32[128,16], index: 1, kind: input, shape index: {}]
  %s2 = inlined_call_operand.vmem [shape: f32[16,32], index: 2, kind: input, shape index: {}]
  %s3 = inlined_call_operand.vmem [shape: f32[1,32], index: 3, kind: input, shape index: {}]
  %s4 = inlined_call_operand.vmem [shape: f32[32,8], index: 4, kind: input, shape index: {}]
  %s5 = inlined_call_operand.vmem [shape: f32[1,8], index: 5, kind: input, shape index: {}]
  %s6 = inlined_call_operand.vmem [shape: f32[128,8], index: 6, kind: output, shape index: {0}]
  %s7 = inlined_call_operand.vmem [shape: f32[128,1], index: 7, kind: output, shape index: {1}]
  %8 = xla_tuple %s6, %s7
  %s9 = sld [smem:[#allocation0]]
  $region42: #{tpu_custom_call.1} parent=0
    _
  %s11 = ssub.s32 1, %s9
  %s12 = scalar_select 0, %s11, %s9
  %13 = sst [smem:[#allocation2]] %s0
  // Predicated region
  $region2: #{tpu_custom_call.1} parent=0 // pred_check
    _
  $region3: #{tpu_custom_call.1} parent=0 // pred_check_branch
    %15 = sbr.rel (0) target = $region5
  $region4: #{tpu_custom_call.1} parent=0 // pred_region
    _
  $region5: #{tpu_custom_call.1} parent=0 // pred_fallthru
    _
  // Predicated region
  $region6: #{tpu_custom_call.1} parent=0 // pred_check
    _
  $region7: #{tpu_custom_call.1} parent=0 // pred_check_branch
    %17 = sbr.rel (0) target = $region9
  $region8: #{tpu_custom_call.1} parent=0 // pred_region
    _
  $region9: #{tpu_custom_call.1} parent=0 // pred_fallthru
    _
  // Predicated region
  $region10: #{tpu_custom_call.1} parent=0 // pred_check
    _
  $region11: #{tpu_custom_call.1} parent=0 // pred_check_branch
    %19 = sbr.rel (0) target = $region13
  $region12: #{tpu_custom_call.1} parent=0 // pred_region
    _
  $region13: #{tpu_custom_call.1} parent=0 // pred_fallthru
    _
  // Predicated region
  $region14: #{tpu_custom_call.1} parent=0 // pred_check
    _
  $region15: #{tpu_custom_call.1} parent=0 // pred_check_branch
    %21 = sbr.rel (0) target = $region17
  $region16: #{tpu_custom_call.1} parent=0 // pred_region
    _
  $region17: #{tpu_custom_call.1} parent=0 // pred_fallthru
    _
  // Predicated region
  $region18: #{tpu_custom_call.1} parent=0 // pred_check
    _
  $region19: #{tpu_custom_call.1} parent=0 // pred_check_branch
    %23 = sbr.rel (0) target = $region21
  $region20: #{tpu_custom_call.1} parent=0 // pred_region
    _
  $region21: #{tpu_custom_call.1} parent=0 // pred_fallthru
    _
  // Predicated region
  $region22: #{tpu_custom_call.1} parent=0 // pred_check
    _
  $region23: #{tpu_custom_call.1} parent=0 // pred_check_branch
    %25 = sbr.rel (0) target = $region25
  $region24: #{tpu_custom_call.1} parent=0 // pred_region
    _
  $region25: #{tpu_custom_call.1} parent=0 // pred_fallthru
    _
  %s26 = sld [smem:[#allocation2]]
  %v27 = vld [vmem:[%s1] sm:$0xff]
  %v28 = vld [vmem:[%s1 + $0x8] sm:$0xff]
  %v29 = vld [vmem:[%s1 + $0x10] sm:$0xff]
  %v30 = vld [vmem:[%s1 + $0x18] sm:$0xff]
  %v31 = vld [vmem:[%s1 + $0x20] sm:$0xff]
  %v32 = vld [vmem:[%s1 + $0x28] sm:$0xff]
  %v33 = vld [vmem:[%s1 + $0x30] sm:$0xff]
  %v34 = vld [vmem:[%s1 + $0x38] sm:$0xff]
  %v35 = vld [vmem:[%s1 + $0x40] sm:$0xff]
  %v36 = vld [vmem:[%s1 + $0x48] sm:$0xff]
  %v37 = vld [vmem:[%s1 + $0x50] sm:$0xff]
  %v38 = vld [vmem:[%s1 + $0x58] sm:$0xff]
  %v39 = vld [vmem:[%s1 + $0x60] sm:$0xff]
  %v40 = vld [vmem:[%s1 + $0x68] sm:$0xff]
  %v41 = vld [vmem:[%s1 + $0x70] sm:$0xff]
  %v42 = vld [vmem:[%s1 + $0x78] sm:$0xff]
  %v43 = vld [vmem:[%s2] sm:$0xff]
  %v44 = vld [vmem:[%s2 + $0x8] sm:$0xff]
  %v45 = vld [vmem:[%s3] sm:$0x1]
  %v47 = vlaneseq
  %v48 = vshrl.u32 %v47, 7
  %v49 = vsub.s32 0, %v48
  %v50 = vrot.slane %v45, %v49
  %vm52 = vcmask 130048
  %v54 = vsel %vm52, %v27, 0
  %v57 = vsel %vm52, %v28, 0
  %v60 = vsel %vm52, %v29, 0
  %v63 = vsel %vm52, %v30, 0
  %v66 = vsel %vm52, %v31, 0
  %v69 = vsel %vm52, %v32, 0
  %v72 = vsel %vm52, %v33, 0
  %v75 = vsel %vm52, %v34, 0
  %v78 = vsel %vm52, %v35, 0
  %v81 = vsel %vm52, %v36, 0
  %v84 = vsel %vm52, %v37, 0
  %v87 = vsel %vm52, %v38, 0
  %v90 = vsel %vm52, %v39, 0
  %v93 = vsel %vm52, %v40, 0
  %v96 = vsel %vm52, %v41, 0
  %v99 = vsel %vm52, %v42, 0
  %101 = vmatprep.subr.mxu0 0.0
  %102 = vmatpush1.msra.mxu0 0.0
  %103 = vmatprep.subr.mxu0 0.0
  %104 = vmatpush1.msra.mxu0 0.0
  %105 = vmatprep.subr.mxu0 0.0
  %106 = vmatpush1.msra.mxu0 0.0
  %107 = vmatprep.subr.mxu0 0.0
  %108 = vmatpush1.msra.mxu0 0.0
  %109 = vmatprep.subr.mxu0 0.0
  %110 = vmatpush1.msra.mxu0 0.0
  %111 = vmatprep.subr.mxu0 0.0
  %112 = vmatpush1.msra.mxu0 0.0
  %113 = vmatprep.subr.mxu0 0.0
  %114 = vmatpush1.msra.mxu0 0.0
  %115 = vmatprep.subr.mxu0 0.0
  %116 = vmatpush1.msra.mxu0 0.0
  %117 = vmatprep.subr.mxu0 0.0
  %118 = vmatpush1.msra.mxu0 0.0
  %119 = vmatprep.subr.mxu0 0.0
  %120 = vmatpush1.msra.mxu0 0.0
  %121 = vmatprep.subr.mxu0 0.0
  %122 = vmatpush1.msra.mxu0 0.0
  %123 = vmatprep.subr.mxu0 0.0
  %124 = vmatpush1.msra.mxu0 0.0
  %125 = vmatprep.subr.mxu0 0.0
  %126 = vmatpush1.msra.mxu0 0.0
  %127 = vmatprep.subr.mxu0 0.0
  %128 = vmatpush1.msra.mxu0 0.0
  %129 = vmatprep.subr.mxu0 0.0
  %130 = vmatpush1.msra.mxu0 %v44
  %131 = vmatprep.subr.mxu0 0.0
  %132 = vmatpush1.msra.mxu0 %v43
  %133 = vmatprep.subr.mxu0 0.0
  %134 = vmatpush2.msra.mxu0 0.0
  %135 = vmatprep.subr.mxu0 0.0
  %136 = vmatpush2.msra.mxu0 0.0
  %137 = vmatprep.subr.mxu0 0.0
  %138 = vmatpush2.msra.mxu0 0.0
  %139 = vmatprep.subr.mxu0 0.0
  %140 = vmatpush2.msra.mxu0 0.0
  %141 = vmatprep.subr.mxu0 0.0
  %142 = vmatpush2.msra.mxu0 0.0
  %143 = vmatprep.subr.mxu0 0.0
  %144 = vmatpush2.msra.mxu0 0.0
  %145 = vmatprep.subr.mxu0 0.0
  %146 = vmatpush2.msra.mxu0 0.0
  %147 = vmatprep.subr.mxu0 0.0
  %148 = vmatpush2.msra.mxu0 0.0
  %149 = vmatprep.subr.mxu0 0.0
  %150 = vmatpush2.msra.mxu0 0.0
  %151 = vmatprep.subr.mxu0 0.0
  %152 = vmatpush2.msra.mxu0 0.0
  %153 = vmatprep.subr.mxu0 0.0
  %154 = vmatpush2.msra.mxu0 0.0
  %155 = vmatprep.subr.mxu0 0.0
  %156 = vmatpush2.msra.mxu0 0.0
  %157 = vmatprep.subr.mxu0 0.0
  %158 = vmatpush2.msra.mxu0 0.0
  %159 = vmatprep.subr.mxu0 0.0
  %160 = vmatpush2.msra.mxu0 0.0
  %161 = vmatprep.subr.mxu0 0.0
  %162 = vmatpush2.msra.mxu0 0.0
  %163 = vmatprep.subr.mxu0 0.0
  %164 = vmatpush2.msra.mxu0 0.0
  %165 = vmatprep.mubr.f32.mxu0 0.0
  %166 = vmatmul.mubr.f32.gmra.mxu0 %v54
  %v167 = vpop.f32.mrf.mxu0
  %v168 = vadd.f32 %v50, %v167
  %v169 = vpop.f32.mrf.mxu0
  %170 = vmatprep.mubr.f32.mxu0 0.0
  %171 = vmatmul.mubr.f32.gmra.mxu0 %v57
  %v172 = vpop.f32.mrf.mxu0
  %v173 = vadd.f32 %v50, %v172
  %v174 = vpop.f32.mrf.mxu0
  %175 = vmatprep.mubr.f32.mxu0 0.0
  %176 = vmatmul.mubr.f32.gmra.mxu0 %v60
  %v177 = vpop.f32.mrf.mxu0
  %v178 = vadd.f32 %v50, %v177
  %v179 = vpop.f32.mrf.mxu0
  %180 = vmatprep.mubr.f32.mxu0 0.0
  %181 = vmatmul.mubr.f32.gmra.mxu0 %v63
  %v182 = vpop.f32.mrf.mxu0
  %v183 = vadd.f32 %v50, %v182
  %v184 = vpop.f32.mrf.mxu0
  %185 = vmatprep.mubr.f32.mxu0 0.0
  %186 = vmatmul.mubr.f32.gmra.mxu0 %v66
  %v187 = vpop.f32.mrf.mxu0
  %v188 = vadd.f32 %v50, %v187
  %v189 = vpop.f32.mrf.mxu0
  %190 = vmatprep.mubr.f32.mxu0 0.0
  %191 = vmatmul.mubr.f32.gmra.mxu0 %v69
  %v192 = vpop.f32.mrf.mxu0
  %v193 = vadd.f32 %v50, %v192
  %v194 = vpop.f32.mrf.mxu0
  %195 = vmatprep.mubr.f32.mxu0 0.0
  %196 = vmatmul.mubr.f32.gmra.mxu0 %v72
  %v197 = vpop.f32.mrf.mxu0
  %v198 = vadd.f32 %v50, %v197
  %v199 = vpop.f32.mrf.mxu0
  %200 = vmatprep.mubr.f32.mxu0 0.0
  %201 = vmatmul.mubr.f32.gmra.mxu0 %v75
  %v202 = vpop.f32.mrf.mxu0
  %v203 = vadd.f32 %v50, %v202
  %v204 = vpop.f32.mrf.mxu0
  %205 = vmatprep.mubr.f32.mxu0 0.0
  %206 = vmatmul.mubr.f32.gmra.mxu0 %v78
  %v207 = vpop.f32.mrf.mxu0
  %v208 = vadd.f32 %v50, %v207
  %v209 = vpop.f32.mrf.mxu0
  %210 = vmatprep.mubr.f32.mxu0 0.0
  %211 = vmatmul.mubr.f32.gmra.mxu0 %v81
  %v212 = vpop.f32.mrf.mxu0
  %v213 = vadd.f32 %v50, %v212
  %v214 = vpop.f32.mrf.mxu0
  %215 = vmatprep.mubr.f32.mxu0 0.0
  %216 = vmatmul.mubr.f32.gmra.mxu0 %v84
  %v217 = vpop.f32.mrf.mxu0
  %v218 = vadd.f32 %v50, %v217
  %v219 = vpop.f32.mrf.mxu0
  %220 = vmatprep.mubr.f32.mxu0 0.0
  %221 = vmatmul.mubr.f32.gmra.mxu0 %v87
  %v222 = vpop.f32.mrf.mxu0
  %v223 = vadd.f32 %v50, %v222
  %v224 = vpop.f32.mrf.mxu0
  %225 = vmatprep.mubr.f32.mxu0 0.0
  %226 = vmatmul.mubr.f32.gmra.mxu0 %v90
  %v227 = vpop.f32.mrf.mxu0
  %v228 = vadd.f32 %v50, %v227
  %v229 = vpop.f32.mrf.mxu0
  %230 = vmatprep.mubr.f32.mxu0 0.0
  %231 = vmatmul.mubr.f32.gmra.mxu0 %v93
  %v232 = vpop.f32.mrf.mxu0
  %v233 = vadd.f32 %v50, %v232
  %v234 = vpop.f32.mrf.mxu0
  %235 = vmatprep.mubr.f32.mxu0 0.0
  %236 = vmatmul.mubr.f32.gmra.mxu0 %v96
  %v237 = vpop.f32.mrf.mxu0
  %v238 = vadd.f32 %v50, %v237
  %v239 = vpop.f32.mrf.mxu0
  %240 = vmatprep.mubr.f32.mxu0 0.0
  %241 = vmatmul.mubr.f32.gmra.mxu0 %v99
  %v242 = vpop.f32.mrf.mxu0
  %v243 = vadd.f32 %v50, %v242
  %v244 = vpop.f32.mrf.mxu0
  %245 = vdwg.mxu0
  %v246 = vmax.f32 %v168, 0.0
  %v247 = vmax.f32 %v173, 0.0
  %v248 = vmax.f32 %v178, 0.0
  %v249 = vmax.f32 %v183, 0.0
  %v250 = vmax.f32 %v188, 0.0
  %v251 = vmax.f32 %v193, 0.0
  %v252 = vmax.f32 %v198, 0.0
  %v253 = vmax.f32 %v203, 0.0
  %v254 = vmax.f32 %v208, 0.0
  %v255 = vmax.f32 %v213, 0.0
  %v256 = vmax.f32 %v218, 0.0
  %v257 = vmax.f32 %v223, 0.0
  %v258 = vmax.f32 %v228, 0.0
  %v259 = vmax.f32 %v233, 0.0
  %v260 = vmax.f32 %v238, 0.0
  %v261 = vmax.f32 %v243, 0.0
  %v262 = vld [vmem:[%s4] sm:$0xff]
  %v263 = vld [vmem:[%s4 + $0x8] sm:$0xff]
  %v264 = vld [vmem:[%s4 + $0x10] sm:$0xff]
  %v265 = vld [vmem:[%s4 + $0x18] sm:$0xff]
  %v266 = vld [vmem:[%s5] sm:$0x1]
  %v268 = vlaneseq
  %v269 = vshrl.u32 %v268, 7
  %v270 = vsub.s32 0, %v269
  %v271 = vrot.slane %v266, %v270
  %vm273 = vcmask 261120
  %v275 = vsel %vm273, %v246, 0
  %v278 = vsel %vm273, %v247, 0
  %v281 = vsel %vm273, %v248, 0
  %v284 = vsel %vm273, %v249, 0
  %v287 = vsel %vm273, %v250, 0
  %v290 = vsel %vm273, %v251, 0
  %v293 = vsel %vm273, %v252, 0
  %v296 = vsel %vm273, %v253, 0
  %v299 = vsel %vm273, %v254, 0
  %v302 = vsel %vm273, %v255, 0
  %v305 = vsel %vm273, %v256, 0
  %v308 = vsel %vm273, %v257, 0
  %v311 = vsel %vm273, %v258, 0
  %v314 = vsel %vm273, %v259, 0
  %v317 = vsel %vm273, %v260, 0
  %v320 = vsel %vm273, %v261, 0
  %322 = vmatprep.subr.mxu0 0.0
  %323 = vmatpush1.msra.mxu0 0.0
  %324 = vmatprep.subr.mxu0 0.0
  %325 = vmatpush1.msra.mxu0 0.0
  %326 = vmatprep.subr.mxu0 0.0
  %327 = vmatpush1.msra.mxu0 0.0
  %328 = vmatprep.subr.mxu0 0.0
  %329 = vmatpush1.msra.mxu0 0.0
  %330 = vmatprep.subr.mxu0 0.0
  %331 = vmatpush1.msra.mxu0 0.0
  %332 = vmatprep.subr.mxu0 0.0
  %333 = vmatpush1.msra.mxu0 0.0
  %334 = vmatprep.subr.mxu0 0.0
  %335 = vmatpush1.msra.mxu0 0.0
  %336 = vmatprep.subr.mxu0 0.0
  %337 = vmatpush1.msra.mxu0 0.0
  %338 = vmatprep.subr.mxu0 0.0
  %339 = vmatpush1.msra.mxu0 0.0
  %340 = vmatprep.subr.mxu0 0.0
  %341 = vmatpush1.msra.mxu0 0.0
  %342 = vmatprep.subr.mxu0 0.0
  %343 = vmatpush1.msra.mxu0 0.0
  %344 = vmatprep.subr.mxu0 0.0
  %345 = vmatpush1.msra.mxu0 0.0
  %346 = vmatprep.subr.mxu0 0.0
  %347 = vmatpush1.msra.mxu0 %v265
  %348 = vmatprep.subr.mxu0 0.0
  %349 = vmatpush1.msra.mxu0 %v264
  %350 = vmatprep.subr.mxu0 0.0
  %351 = vmatpush1.msra.mxu0 %v263
  %352 = vmatprep.subr.mxu0 0.0
  %353 = vmatpush1.msra.mxu0 %v262
  %354 = vmatprep.subr.mxu0 0.0
  %355 = vmatpush2.msra.mxu0 0.0
  %356 = vmatprep.subr.mxu0 0.0
  %357 = vmatpush2.msra.mxu0 0.0
  %358 = vmatprep.subr.mxu0 0.0
  %359 = vmatpush2.msra.mxu0 0.0
  %360 = vmatprep.subr.mxu0 0.0
  %361 = vmatpush2.msra.mxu0 0.0
  %362 = vmatprep.subr.mxu0 0.0
  %363 = vmatpush2.msra.mxu0 0.0
  %364 = vmatprep.subr.mxu0 0.0
  %365 = vmatpush2.msra.mxu0 0.0
  %366 = vmatprep.subr.mxu0 0.0
  %367 = vmatpush2.msra.mxu0 0.0
  %368 = vmatprep.subr.mxu0 0.0
  %369 = vmatpush2.msra.mxu0 0.0
  %370 = vmatprep.subr.mxu0 0.0
  %371 = vmatpush2.msra.mxu0 0.0
  %372 = vmatprep.subr.mxu0 0.0
  %373 = vmatpush2.msra.mxu0 0.0
  %374 = vmatprep.subr.mxu0 0.0
  %375 = vmatpush2.msra.mxu0 0.0
  %376 = vmatprep.subr.mxu0 0.0
  %377 = vmatpush2.msra.mxu0 0.0
  %378 = vmatprep.subr.mxu0 0.0
  %379 = vmatpush2.msra.mxu0 0.0
  %380 = vmatprep.subr.mxu0 0.0
  %381 = vmatpush2.msra.mxu0 0.0
  %382 = vmatprep.subr.mxu0 0.0
  %383 = vmatpush2.msra.mxu0 0.0
  %384 = vmatprep.subr.mxu0 0.0
  %385 = vmatpush2.msra.mxu0 0.0
  %386 = vmatprep.mubr.f32.mxu0 0.0
  %387 = vmatmul.mubr.f32.gmra.mxu0 %v275
  %v388 = vpop.f32.mrf.mxu0
  %v389 = vadd.f32 %v271, %v388
  %v390 = vpop.f32.mrf.mxu0
  %391 = vmatprep.mubr.f32.mxu0 0.0
  %392 = vmatmul.mubr.f32.gmra.mxu0 %v278
  %v393 = vpop.f32.mrf.mxu0
  %v394 = vadd.f32 %v271, %v393
  %v395 = vpop.f32.mrf.mxu0
  %396 = vmatprep.mubr.f32.mxu0 0.0
  %397 = vmatmul.mubr.f32.gmra.mxu0 %v281
  %v398 = vpop.f32.mrf.mxu0
  %v399 = vadd.f32 %v271, %v398
  %v400 = vpop.f32.mrf.mxu0
  %401 = vmatprep.mubr.f32.mxu0 0.0
  %402 = vmatmul.mubr.f32.gmra.mxu0 %v284
  %v403 = vpop.f32.mrf.mxu0
  %v404 = vadd.f32 %v271, %v403
  %v405 = vpop.f32.mrf.mxu0
  %406 = vmatprep.mubr.f32.mxu0 0.0
  %407 = vmatmul.mubr.f32.gmra.mxu0 %v287
  %v408 = vpop.f32.mrf.mxu0
  %v409 = vadd.f32 %v271, %v408
  %v410 = vpop.f32.mrf.mxu0
  %411 = vmatprep.mubr.f32.mxu0 0.0
  %412 = vmatmul.mubr.f32.gmra.mxu0 %v290
  %v413 = vpop.f32.mrf.mxu0
  %v414 = vadd.f32 %v271, %v413
  %v415 = vpop.f32.mrf.mxu0
  %416 = vmatprep.mubr.f32.mxu0 0.0
  %417 = vmatmul.mubr.f32.gmra.mxu0 %v293
  %v418 = vpop.f32.mrf.mxu0
  %v419 = vadd.f32 %v271, %v418
  %v420 = vpop.f32.mrf.mxu0
  %421 = vmatprep.mubr.f32.mxu0 0.0
  %422 = vmatmul.mubr.f32.gmra.mxu0 %v296
  %v423 = vpop.f32.mrf.mxu0
  %v424 = vadd.f32 %v271, %v423
  %v425 = vpop.f32.mrf.mxu0
  %426 = vmatprep.mubr.f32.mxu0 0.0
  %427 = vmatmul.mubr.f32.gmra.mxu0 %v299
  %v428 = vpop.f32.mrf.mxu0
  %v429 = vadd.f32 %v271, %v428
  %v430 = vpop.f32.mrf.mxu0
  %431 = vmatprep.mubr.f32.mxu0 0.0
  %432 = vmatmul.mubr.f32.gmra.mxu0 %v302
  %v433 = vpop.f32.mrf.mxu0
  %v434 = vadd.f32 %v271, %v433
  %v435 = vpop.f32.mrf.mxu0
  %436 = vmatprep.mubr.f32.mxu0 0.0
  %437 = vmatmul.mubr.f32.gmra.mxu0 %v305
  %v438 = vpop.f32.mrf.mxu0
  %v439 = vadd.f32 %v271, %v438
  %v440 = vpop.f32.mrf.mxu0
  %441 = vmatprep.mubr.f32.mxu0 0.0
  %442 = vmatmul.mubr.f32.gmra.mxu0 %v308
  %v443 = vpop.f32.mrf.mxu0
  %v444 = vadd.f32 %v271, %v443
  %v445 = vpop.f32.mrf.mxu0
  %446 = vmatprep.mubr.f32.mxu0 0.0
  %447 = vmatmul.mubr.f32.gmra.mxu0 %v311
  %v448 = vpop.f32.mrf.mxu0
  %v449 = vadd.f32 %v271, %v448
  %v450 = vpop.f32.mrf.mxu0
  %451 = vmatprep.mubr.f32.mxu0 0.0
  %452 = vmatmul.mubr.f32.gmra.mxu0 %v314
  %v453 = vpop.f32.mrf.mxu0
  %v454 = vadd.f32 %v271, %v453
  %v455 = vpop.f32.mrf.mxu0
  %456 = vmatprep.mubr.f32.mxu0 0.0
  %457 = vmatmul.mubr.f32.gmra.mxu0 %v317
  %v458 = vpop.f32.mrf.mxu0
  %v459 = vadd.f32 %v271, %v458
  %v460 = vpop.f32.mrf.mxu0
  %461 = vmatprep.mubr.f32.mxu0 0.0
  %462 = vmatmul.mubr.f32.gmra.mxu0 %v320
  %v463 = vpop.f32.mrf.mxu0
  %v464 = vadd.f32 %v271, %v463
  %v465 = vpop.f32.mrf.mxu0
  %466 = vdwg.mxu0
  %v467 = vstv %s26
  %v468 = vmul.f32 %v389, %v467
  %v469 = vmul.f32 %v394, %v467
  %v470 = vmul.f32 %v399, %v467
  %v471 = vmul.f32 %v404, %v467
  %v472 = vmul.f32 %v409, %v467
  %v473 = vmul.f32 %v414, %v467
  %v474 = vmul.f32 %v419, %v467
  %v475 = vmul.f32 %v424, %v467
  %v476 = vmul.f32 %v429, %v467
  %v477 = vmul.f32 %v434, %v467
  %v478 = vmul.f32 %v439, %v467
  %v479 = vmul.f32 %v444, %v467
  %v480 = vmul.f32 %v449, %v467
  %v481 = vmul.f32 %v454, %v467
  %v482 = vmul.f32 %v459, %v467
  %v483 = vmul.f32 %v464, %v467
  %vm484 = vcmask 64512
  %485 = vst.msk [vmem:[%s6] sm:$0xff] %vm484, %v468
  %486 = vst.msk [vmem:[%s6 + $0x8] sm:$0xff] %vm484, %v469
  %487 = vst.msk [vmem:[%s6 + $0x10] sm:$0xff] %vm484, %v470
  %488 = vst.msk [vmem:[%s6 + $0x18] sm:$0xff] %vm484, %v471
  %489 = vst.msk [vmem:[%s6 + $0x20] sm:$0xff] %vm484, %v472
  %490 = vst.msk [vmem:[%s6 + $0x28] sm:$0xff] %vm484, %v473
  %491 = vst.msk [vmem:[%s6 + $0x30] sm:$0xff] %vm484, %v474
  %492 = vst.msk [vmem:[%s6 + $0x38] sm:$0xff] %vm484, %v475
  %493 = vst.msk [vmem:[%s6 + $0x40] sm:$0xff] %vm484, %v476
  %494 = vst.msk [vmem:[%s6 + $0x48] sm:$0xff] %vm484, %v477
  %495 = vst.msk [vmem:[%s6 + $0x50] sm:$0xff] %vm484, %v478
  %496 = vst.msk [vmem:[%s6 + $0x58] sm:$0xff] %vm484, %v479
  %497 = vst.msk [vmem:[%s6 + $0x60] sm:$0xff] %vm484, %v480
  %498 = vst.msk [vmem:[%s6 + $0x68] sm:$0xff] %vm484, %v481
  %499 = vst.msk [vmem:[%s6 + $0x70] sm:$0xff] %vm484, %v482
  %500 = vst.msk [vmem:[%s6 + $0x78] sm:$0xff] %vm484, %v483
  %v501 = vmul.f32 %v468, %v468
  %v502 = vmul.f32 %v469, %v469
  %v503 = vmul.f32 %v470, %v470
  %v504 = vmul.f32 %v471, %v471
  %v505 = vmul.f32 %v472, %v472
  %v506 = vmul.f32 %v473, %v473
  %v507 = vmul.f32 %v474, %v474
  %v508 = vmul.f32 %v475, %v475
  %v509 = vmul.f32 %v476, %v476
  %v510 = vmul.f32 %v477, %v477
  %v511 = vmul.f32 %v478, %v478
  %v512 = vmul.f32 %v479, %v479
  %v513 = vmul.f32 %v480, %v480
  %v514 = vmul.f32 %v481, %v481
  %v515 = vmul.f32 %v482, %v482
  %v516 = vmul.f32 %v483, %v483
  %v517 = vsel %vm484, %v501, 0.0
  %518 = vadd.xlane.f32.xlu0 %v517
  %v519 = vpop.xlane.xlu0 %518
  %v520 = vsel %vm484, %v502, 0.0
  %521 = vadd.xlane.f32.xlu0 %v520
  %v522 = vpop.xlane.xlu0 %521
  %v523 = vsel %vm484, %v503, 0.0
  %524 = vadd.xlane.f32.xlu0 %v523
  %v525 = vpop.xlane.xlu0 %524
  %v526 = vsel %vm484, %v504, 0.0
  %527 = vadd.xlane.f32.xlu0 %v526
  %v528 = vpop.xlane.xlu0 %527
  %v529 = vsel %vm484, %v505, 0.0
  %530 = vadd.xlane.f32.xlu0 %v529
  %v531 = vpop.xlane.xlu0 %530
  %v532 = vsel %vm484, %v506, 0.0
  %533 = vadd.xlane.f32.xlu0 %v532
  %v534 = vpop.xlane.xlu0 %533
  %v535 = vsel %vm484, %v507, 0.0
  %536 = vadd.xlane.f32.xlu0 %v535
  %v537 = vpop.xlane.xlu0 %536
  %v538 = vsel %vm484, %v508, 0.0
  %539 = vadd.xlane.f32.xlu0 %v538
  %v540 = vpop.xlane.xlu0 %539
  %v541 = vsel %vm484, %v509, 0.0
  %542 = vadd.xlane.f32.xlu0 %v541
  %v543 = vpop.xlane.xlu0 %542
  %v544 = vsel %vm484, %v510, 0.0
  %545 = vadd.xlane.f32.xlu0 %v544
  %v546 = vpop.xlane.xlu0 %545
  %v547 = vsel %vm484, %v511, 0.0
  %548 = vadd.xlane.f32.xlu0 %v547
  %v549 = vpop.xlane.xlu0 %548
  %v550 = vsel %vm484, %v512, 0.0
  %551 = vadd.xlane.f32.xlu0 %v550
  %v552 = vpop.xlane.xlu0 %551
  %v553 = vsel %vm484, %v513, 0.0
  %554 = vadd.xlane.f32.xlu0 %v553
  %v555 = vpop.xlane.xlu0 %554
  %v556 = vsel %vm484, %v514, 0.0
  %557 = vadd.xlane.f32.xlu0 %v556
  %v558 = vpop.xlane.xlu0 %557
  %v559 = vsel %vm484, %v515, 0.0
  %560 = vadd.xlane.f32.xlu0 %v559
  %v561 = vpop.xlane.xlu0 %560
  %v562 = vsel %vm484, %v516, 0.0
  %563 = vadd.xlane.f32.xlu0 %v562
  %v564 = vpop.xlane.xlu0 %563
  %v565 = vmul.f32 %v519, -0.5
  %v566 = vmul.f32 %v522, -0.5
  %v567 = vmul.f32 %v525, -0.5
  %v568 = vmul.f32 %v528, -0.5
  %v569 = vmul.f32 %v531, -0.5
  %v570 = vmul.f32 %v534, -0.5
  %v571 = vmul.f32 %v537, -0.5
  %v572 = vmul.f32 %v540, -0.5
  %v573 = vmul.f32 %v543, -0.5
  %v574 = vmul.f32 %v546, -0.5
  %v575 = vmul.f32 %v549, -0.5
  %v576 = vmul.f32 %v552, -0.5
  %v577 = vmul.f32 %v555, -0.5
  %v578 = vmul.f32 %v558, -0.5
  %v579 = vmul.f32 %v561, -0.5
  %v580 = vmul.f32 %v564, -0.5
  %vm581 = vcmask 7168
  %582 = vst.msk [vmem:[%s7] sm:$0xff] %vm581, %v565
  %583 = vst.msk [vmem:[%s7 + $0x8] sm:$0xff] %vm581, %v566
  %584 = vst.msk [vmem:[%s7 + $0x10] sm:$0xff] %vm581, %v567
  %585 = vst.msk [vmem:[%s7 + $0x18] sm:$0xff] %vm581, %v568
  %586 = vst.msk [vmem:[%s7 + $0x20] sm:$0xff] %vm581, %v569
  %587 = vst.msk [vmem:[%s7 + $0x28] sm:$0xff] %vm581, %v570
  %588 = vst.msk [vmem:[%s7 + $0x30] sm:$0xff] %vm581, %v571
  %589 = vst.msk [vmem:[%s7 + $0x38] sm:$0xff] %vm581, %v572
  %590 = vst.msk [vmem:[%s7 + $0x40] sm:$0xff] %vm581, %v573
  %591 = vst.msk [vmem:[%s7 + $0x48] sm:$0xff] %vm581, %v574
  %592 = vst.msk [vmem:[%s7 + $0x50] sm:$0xff] %vm581, %v575
  %593 = vst.msk [vmem:[%s7 + $0x58] sm:$0xff] %vm581, %v576
  %594 = vst.msk [vmem:[%s7 + $0x60] sm:$0xff] %vm581, %v577
  %595 = vst.msk [vmem:[%s7 + $0x68] sm:$0xff] %vm581, %v578
  %596 = vst.msk [vmem:[%s7 + $0x70] sm:$0xff] %vm581, %v579
  %597 = vst.msk [vmem:[%s7 + $0x78] sm:$0xff] %vm581, %v580
  // Predicated region
  $region26: #{tpu_custom_call.1} parent=0 // pred_check
    _
  $region27: #{tpu_custom_call.1} parent=0 // pred_check_branch
    %599 = sbr.rel (0) target = $region29
  $region28: #{tpu_custom_call.1} parent=0 // pred_region
    _
  $region29: #{tpu_custom_call.1} parent=0 // pred_fallthru
    _
  // Predicated region
  $region30: #{tpu_custom_call.1} parent=0 // pred_check
    _
  $region31: #{tpu_custom_call.1} parent=0 // pred_check_branch
    %601 = sbr.rel (0) target = $region33
  $region32: #{tpu_custom_call.1} parent=0 // pred_region
    _
  $region33: #{tpu_custom_call.1} parent=0 // pred_fallthru
    _
  // Predicated region
  $region34: #{tpu_custom_call.1} parent=0 // pred_check
    _
  $region35: #{tpu_custom_call.1} parent=0 // pred_check_branch
    %603 = sbr.rel (0) target = $region37
  $region36: #{tpu_custom_call.1} parent=0 // pred_region
    _
  $region37: #{tpu_custom_call.1} parent=0 // pred_fallthru
    _
  // Predicated region
  $region38: #{tpu_custom_call.1} parent=0 // pred_check
    _
  $region39: #{tpu_custom_call.1} parent=0 // pred_check_branch
    %605 = sbr.rel (0) target = $region41
  $region40: #{tpu_custom_call.1} parent=0 // pred_region
    _
  $region41: #{tpu_custom_call.1} parent=0 // pred_fallthru
    _

</llo_original>
